<compile_context>
chip_gen: v5e
topology: v5e:2x2
jax: 0.10.0
libtpu: 0.0.40
codegen_flags: <defaults>
</compile_context>

<pallas_src>
import functools

import jax
import jax.numpy as jnp
from jax.experimental import pallas as pl
from jax.experimental.pallas import tpu as pltpu

_LANE = 128
_SUBLANE = 8
_MXU_DIM = 256  # v6e/v7x MXU side; only used when a real feature dim > 128


def _round_up(x, m):
    return ((x + m - 1) // m) * m


def _cdiv(a, b):
    return (a + b - 1) // b


def _pad_dim(dim):
    """Lane-dense padding for N / K dims: 128 minimum, 256-multiples above."""
    if dim <= _LANE:
        return _LANE
    return _round_up(dim, _MXU_DIM)


def _resident_spec(shape):
    """BlockSpec for a grid-invariant (weight/bias) block.

    Constant index_map => VMEM-resident across grid steps; single-buffered
    (Buffered(1)) since there is nothing to pipeline for a constant block.
    Falls back to the default (double-buffered) spec on older jax versions.
    """
    try:
        return pl.BlockSpec(shape, lambda i: (0, 0), pipeline_mode=pl.Buffered(1))
    except TypeError:
        return pl.BlockSpec(shape, lambda i: (0, 0))


def _mapping_net_fused_kernel(x_ref, *refs, depth, negative_slope):
    """Fused MappingNet forward.

    refs layout: (w0, b0, w1, b1, ..., w_{depth-1}, b_{depth-1}, out)
    """
    o_ref = refs[-1]
    h = x_ref[...].astype(jnp.float32)  # f32 activations (v5e-safe VPU path)
    for l in range(depth):
        w_ref = refs[2 * l]
        b_ref = refs[2 * l + 1]
        # MXU matmul: activations cast to the weight compute dtype, f32 accum.
        y = jnp.dot(h.astype(w_ref.dtype), w_ref[...],
                    preferred_element_type=jnp.float32)
        y = y + b_ref[...].astype(jnp.float32)
        # LeakyReLU(slope), 0 < slope < 1: max(y, slope*y) saves the compare.
        h = jnp.maximum(y, negative_slope * y)
    o_ref[...] = h.astype(o_ref.dtype)


def prepare_params(params, *, compute_dtype=jnp.bfloat16):
    """Pad/cast parameters once; reuse across forwards.

    * Layer 0 keeps its true K (= context_dim) so the context tensor needs no
      feature-dim padding (and no in-kernel masking).
    * Every N dim (and the K of layers > 0) is padded lane-dense; padded bias
      columns are 0 and LeakyReLU(0) = 0, so padding stays exact end-to-end.
    * compute_dtype=jnp.float32 is the exact-precision fallback if downstream
      is sensitive to the bf16 MXU path.
    """
    ws, bs = [], []
    for l, (w, b) in enumerate(params):
        in_dim, out_dim = w.shape
        in_pad = in_dim if l == 0 else _pad_dim(in_dim)
        out_pad = _pad_dim(out_dim)
        w_p = jnp.zeros((in_pad, out_pad), compute_dtype)
        w_p = w_p.at[:in_dim, :out_dim].set(w.astype(compute_dtype))
        b_p = jnp.zeros((1, out_pad), jnp.float32)
        b_p = b_p.at[:, :out_dim].set(b.reshape(1, -1).astype(jnp.float32))
        ws.append(w_p)
        bs.append(b_p)
    return {
        "ws": ws,
        "bs": bs,
        "context_dim": params[0][0].shape[0],
        "style_dim": params[-1][0].shape[1],
    }


def _choose_tile_m(batch, tile_m_max):
    """Balanced batch tiles, multiples of 8 sublanes, >=2 grid steps when
    batch allows (so v7x's two TensorCores both get work)."""
    if batch <= _SUBLANE:
        return _round_up(batch, _SUBLANE)
    steps = max(2, _cdiv(batch, tile_m_max))
    tm = _round_up(_cdiv(batch, steps), _SUBLANE)
    return min(tm, _round_up(batch, _SUBLANE))


def mapping_net_forward(context, prepared, *, negative_slope=0.1, tile_m=1024,
                        out_dtype=None, unpad_output=True):
    """Run the fused MappingNet kernel.

    context: (batch, context_dim), any float dtype (streamed as-is, cast
    in-kernel).  out_dtype defaults to context.dtype; pass jnp.bfloat16 to
    halve output writeback when the consumer tolerates it.  unpad_output=False
    returns the lane-padded (batch, out_pad) slab and skips the slice pass.
    """
    ws, bs = prepared["ws"], prepared["bs"]
    style_dim = prepared["style_dim"]
    depth = len(ws)

    batch, in_dim = context.shape
    assert in_dim == ws[0].shape[0], "context_dim mismatch with prepared params"
    out_pad = ws[-1].shape[1]
    out_dtype = context.dtype if out_dtype is None else out_dtype

    tm = _choose_tile_m(batch, tile_m)
    grid_m = _cdiv(batch, tm)  # ragged last tile handled by Pallas; no jnp.pad

    in_specs = [pl.BlockSpec((tm, in_dim), lambda i: (i, 0))]
    flat_args = [context]
    for w, b in zip(ws, bs):
        in_specs.append(_resident_spec(w.shape))
        in_specs.append(_resident_spec(b.shape))
        flat_args.append(w)
        flat_args.append(b)

    # Cost hint for XLA's scheduler (flops on padded dims, resident weights
    # counted once).
    param_bytes = sum(w.size * w.dtype.itemsize + b.size * b.dtype.itemsize
                      for w, b in zip(ws, bs))
    flops = 2 * batch * sum(w.shape[0] * w.shape[1] for w in ws)
    bytes_accessed = (context.size * context.dtype.itemsize
                      + batch * out_pad * jnp.dtype(out_dtype).itemsize
                      + param_bytes)
    cost = pl.CostEstimate(flops=flops, transcendentals=0,
                           bytes_accessed=bytes_accessed)

    # Explicit scoped-VMEM budget: resident params (single-buffered) +
    # double-buffered x/out tiles + f32 activation working set, 2x headroom,
    # clamped to 64 MiB (safe on every generation incl. v7x).
    vmem_bytes = param_bytes
    vmem_bytes += 2 * tm * in_dim * context.dtype.itemsize
    vmem_bytes += 2 * tm * out_pad * jnp.dtype(out_dtype).itemsize
    vmem_bytes += 2 * tm * out_pad * 4
    vmem_limit = int(min(max(2 * vmem_bytes, 32 << 20), 64 << 20))

    kernel = functools.partial(
        _mapping_net_fused_kernel, depth=depth, negative_slope=negative_slope
    )
    out = pl.pallas_call(
        kernel,
        out_shape=jax.ShapeDtypeStruct((batch, out_pad), out_dtype),
        grid_spec=pl.GridSpec(
            grid=(grid_m,),
            in_specs=in_specs,
            out_specs=pl.BlockSpec((tm, out_pad), lambda i: (i, 0)),
        ),
        compiler_params=pltpu.CompilerParams(
            dimension_semantics=("parallel",),
            vmem_limit_bytes=vmem_limit,
        ),
        cost_estimate=cost,
    )(*flat_args)

    if unpad_output:
        # Matches the PyTorch module's output shape; consumers that accept the
        # lane-padded slab should pass unpad_output=False to skip this pass.
        return out[:, :style_dim]
    return out


def init_mapping_net_params(key, depth, style_dim, context_dim):
    """Deterministic parameter init (shapes match nn.Linear in the module)."""
    params = []
    for i in range(depth):
        in_dim = context_dim if i == 0 else style_dim
        key, wk, bk = jax.random.split(key, 3)
        bound = 1.0 / jnp.sqrt(jnp.asarray(in_dim, jnp.float32))
        w = jax.random.uniform(wk, (in_dim, style_dim), jnp.float32, -bound, bound)
        b = jax.random.uniform(bk, (1, style_dim), jnp.float32, -bound, bound)
        params.append((w, b))
    return params


def mapping_net_reference(context, params, *, negative_slope=0.1):
    """Pure-JAX f32 reference matching the PyTorch module semantics."""
    h = context
    for (w, b) in params:
        h = h @ w + b
        h = jnp.where(h >= 0.0, h, negative_slope * h)
    return h


if __name__ == "__main__":
    depth = 3
    style_dim = 32
    context_dim = 16
    batch = 8

    key = jax.random.PRNGKey(0)
    key, xk = jax.random.split(key)
    context = jax.random.normal(xk, (batch, context_dim), jnp.float32)
    params = init_mapping_net_params(key, depth, style_dim, context_dim)

    prepared = prepare_params(params)  # pad + cast once, reused per call

    out = mapping_net_forward(context, prepared)
    out = jax.block_until_ready(out)

    ref = mapping_net_reference(context, params)
    assert out.shape == (batch, style_dim)
    # Tolerance loosened for the bf16-weight MXU path (f32 accumulation);
    # prepare_params(compute_dtype=jnp.float32) is the exact fallback.
    assert jnp.allclose(out, ref, atol=3e-2, rtol=3e-2), (
        float(jnp.max(jnp.abs(out - ref)))
    )

    print("KERNEL_OK")
</pallas_src>

<mosaic_0001>
module attributes {stable_mosaic.version = 11 : i64} {
  func.func @_mapping_net_fused_kernel(%arg0: i32, %arg1: memref<8x16xf32, #tpu.memory_space<vmem>>, %arg2: memref<16x128xbf16, #tpu.memory_space<vmem>>, %arg3: memref<1x128xf32, #tpu.memory_space<vmem>>, %arg4: memref<128x128xbf16, #tpu.memory_space<vmem>>, %arg5: memref<1x128xf32, #tpu.memory_space<vmem>>, %arg6: memref<128x128xbf16, #tpu.memory_space<vmem>>, %arg7: memref<1x128xf32, #tpu.memory_space<vmem>>, %arg8: memref<8x128xf32, #tpu.memory_space<vmem>>) attributes {dimension_semantics = [#tpu.dimension_semantics<parallel>], iteration_bounds = array<i64: 1>, scalar_prefetch = 0 : i64, scratch_operands = 0 : i64, tpu.core_type = #tpu.core_type<tc>, window_params = [{transform_indices = @transform_0, window_bounds = array<i64: 8, 16>}, {pipeline_mode = #tpu.pipeline_mode<synchronous>, transform_indices = @transform_1, window_bounds = array<i64: 16, 128>}, {pipeline_mode = #tpu.pipeline_mode<synchronous>, transform_indices = @transform_2, window_bounds = array<i64: 1, 128>}, {pipeline_mode = #tpu.pipeline_mode<synchronous>, transform_indices = @transform_3, window_bounds = array<i64: 128, 128>}, {pipeline_mode = #tpu.pipeline_mode<synchronous>, transform_indices = @transform_4, window_bounds = array<i64: 1, 128>}, {pipeline_mode = #tpu.pipeline_mode<synchronous>, transform_indices = @transform_5, window_bounds = array<i64: 128, 128>}, {pipeline_mode = #tpu.pipeline_mode<synchronous>, transform_indices = @transform_6, window_bounds = array<i64: 1, 128>}, {transform_indices = @transform_7, window_bounds = array<i64: 8, 128>}]} {
    %c0 = arith.constant 0 : index
    %c0_0 = arith.constant 0 : index
    %0 = vector.load %arg1[%c0, %c0_0] : memref<8x16xf32, #tpu.memory_space<vmem>>, vector<8x16xf32>
    %1 = arith.truncf %0 : vector<8x16xf32> to vector<8x16xbf16>
    %c0_1 = arith.constant 0 : index
    %c0_2 = arith.constant 0 : index
    %2 = vector.load %arg2[%c0_1, %c0_2] : memref<16x128xbf16, #tpu.memory_space<vmem>>, vector<16x128xbf16>
    %cst = arith.constant dense<0.000000e+00> : vector<8x128xf32>
    %3 = tpu.matmul %1, %2, %cst {dimension_numbers = #tpu.dot_dimension_numbers<[1], [0], [0], [1], [0, 0, 1, 1], [], []>} : vector<8x16xbf16>, vector<16x128xbf16>, vector<8x128xf32> -> vector<8x128xf32>
    %c0_3 = arith.constant 0 : index
    %c0_4 = arith.constant 0 : index
    %4 = vector.load %arg3[%c0_3, %c0_4] : memref<1x128xf32, #tpu.memory_space<vmem>>, vector<1x128xf32>
    %5 = vector.broadcast %4 : vector<1x128xf32> to vector<8x128xf32>
    %6 = arith.addf %3, %5 : vector<8x128xf32>
    %cst_5 = arith.constant 1.000000e-01 : f32
    %7 = vector.broadcast %cst_5 : f32 to vector<8x128xf32>
    %8 = arith.mulf %7, %6 : vector<8x128xf32>
    %9 = arith.maximumf %6, %8 : vector<8x128xf32>
    %10 = arith.truncf %9 : vector<8x128xf32> to vector<8x128xbf16>
    %c0_6 = arith.constant 0 : index
    %c0_7 = arith.constant 0 : index
    %11 = vector.load %arg4[%c0_6, %c0_7] : memref<128x128xbf16, #tpu.memory_space<vmem>>, vector<128x128xbf16>
    %cst_8 = arith.constant dense<0.000000e+00> : vector<8x128xf32>
    %12 = tpu.matmul %10, %11, %cst_8 {dimension_numbers = #tpu.dot_dimension_numbers<[1], [0], [0], [1], [0, 0, 1, 1], [], []>} : vector<8x128xbf16>, vector<128x128xbf16>, vector<8x128xf32> -> vector<8x128xf32>
    %c0_9 = arith.constant 0 : index
    %c0_10 = arith.constant 0 : index
    %13 = vector.load %arg5[%c0_9, %c0_10] : memref<1x128xf32, #tpu.memory_space<vmem>>, vector<1x128xf32>
    %14 = vector.broadcast %13 : vector<1x128xf32> to vector<8x128xf32>
    %15 = arith.addf %12, %14 : vector<8x128xf32>
    %cst_11 = arith.constant 1.000000e-01 : f32
    %16 = vector.broadcast %cst_11 : f32 to vector<8x128xf32>
    %17 = arith.mulf %16, %15 : vector<8x128xf32>
    %18 = arith.maximumf %15, %17 : vector<8x128xf32>
    %19 = arith.truncf %18 : vector<8x128xf32> to vector<8x128xbf16>
    %c0_12 = arith.constant 0 : index
    %c0_13 = arith.constant 0 : index
    %20 = vector.load %arg6[%c0_12, %c0_13] : memref<128x128xbf16, #tpu.memory_space<vmem>>, vector<128x128xbf16>
    %cst_14 = arith.constant dense<0.000000e+00> : vector<8x128xf32>
    %21 = tpu.matmul %19, %20, %cst_14 {dimension_numbers = #tpu.dot_dimension_numbers<[1], [0], [0], [1], [0, 0, 1, 1], [], []>} : vector<8x128xbf16>, vector<128x128xbf16>, vector<8x128xf32> -> vector<8x128xf32>
    %c0_15 = arith.constant 0 : index
    %c0_16 = arith.constant 0 : index
    %22 = vector.load %arg7[%c0_15, %c0_16] : memref<1x128xf32, #tpu.memory_space<vmem>>, vector<1x128xf32>
    %23 = vector.broadcast %22 : vector<1x128xf32> to vector<8x128xf32>
    %24 = arith.addf %21, %23 : vector<8x128xf32>
    %cst_17 = arith.constant 1.000000e-01 : f32
    %25 = vector.broadcast %cst_17 : f32 to vector<8x128xf32>
    %26 = arith.mulf %25, %24 : vector<8x128xf32>
    %27 = arith.maximumf %24, %26 : vector<8x128xf32>
    %c0_18 = arith.constant 0 : index
    %c0_19 = arith.constant 0 : index
    %28 = vector.load %arg8[%c0_18, %c0_19] : memref<8x128xf32, #tpu.memory_space<vmem>>, vector<8x128xf32>
    tpu.vector_store %arg8[%c0_18, %c0_19], %27 {strides = array<i32>} : memref<8x128xf32, #tpu.memory_space<vmem>>, vector<8x128xf32>,
    return
  }
  func.func @transform_0(%arg0: i32) -> (i32, i32) {
    %c0_i32 = arith.constant 0 : i32
    %c0_i32_0 = arith.constant 0 : i32
    return %arg0, %c0_i32 : i32, i32
  }
  func.func @transform_1(%arg0: i32) -> (i32, i32) {
    %c0_i32 = arith.constant 0 : i32
    %c0_i32_0 = arith.constant 0 : i32
    %c0_i32_1 = arith.constant 0 : i32
    return %c0_i32, %c0_i32_0 : i32, i32
  }
  func.func @transform_2(%arg0: i32) -> (i32, i32) {
    %c0_i32 = arith.constant 0 : i32
    %c0_i32_0 = arith.constant 0 : i32
    %c0_i32_1 = arith.constant 0 : i32
    return %c0_i32, %c0_i32_0 : i32, i32
  }
  func.func @transform_3(%arg0: i32) -> (i32, i32) {
    %c0_i32 = arith.constant 0 : i32
    %c0_i32_0 = arith.constant 0 : i32
    %c0_i32_1 = arith.constant 0 : i32
    return %c0_i32, %c0_i32_0 : i32, i32
  }
  func.func @transform_4(%arg0: i32) -> (i32, i32) {
    %c0_i32 = arith.constant 0 : i32
    %c0_i32_0 = arith.constant 0 : i32
    %c0_i32_1 = arith.constant 0 : i32
    return %c0_i32, %c0_i32_0 : i32, i32
  }
  func.func @transform_5(%arg0: i32) -> (i32, i32) {
    %c0_i32 = arith.constant 0 : i32
    %c0_i32_0 = arith.constant 0 : i32
    %c0_i32_1 = arith.constant 0 : i32
    return %c0_i32, %c0_i32_0 : i32, i32
  }
  func.func @transform_6(%arg0: i32) -> (i32, i32) {
    %c0_i32 = arith.constant 0 : i32
    %c0_i32_0 = arith.constant 0 : i32
    %c0_i32_1 = arith.constant 0 : i32
    return %c0_i32, %c0_i32_0 : i32, i32
  }
  func.func @transform_7(%arg0: i32) -> (i32, i32) {
    %c0_i32 = arith.constant 0 : i32
    %c0_i32_0 = arith.constant 0 : i32
    return %arg0, %c0_i32 : i32, i32
  }
}

</mosaic_0001>

<llo_original>
// kernel: tpu_custom_call.1
$region0: #{tpu_custom_call.1}
  #allocation0 [shape = 'u32[]', space=smem, size = 0x4, offset = 0x4, fixed_abs, tag = 'smem constant byte address 0x4 - core index']
  #allocation1 [shape = 'u32[72,128]{1,0:T(1,128)}', space=vmem, size = 0x9000, scoped, tag = 'internal scratch']
  %s0 = inlined_call_operand.hbm [shape: f32[8,16], index: 0, kind: input, shape index: {}]
  %s1 = inlined_call_operand.hbm [shape: bf16[16,128], index: 1, kind: input, shape index: {}]
  %s2 = inlined_call_operand.vmem [shape: f32[1,128], index: 2, kind: input, shape index: {}]
  %s3 = inlined_call_operand.hbm [shape: bf16[128,128], index: 3, kind: input, shape index: {}]
  %s4 = inlined_call_operand.vmem [shape: f32[1,128], index: 4, kind: input, shape index: {}]
  %s5 = inlined_call_operand.hbm [shape: bf16[128,128], index: 5, kind: input, shape index: {}]
  %s6 = inlined_call_operand.vmem [shape: f32[1,128], index: 6, kind: input, shape index: {}]
  %s7 = inlined_call_operand.hbm [shape: f32[8,128], index: 7, kind: output, shape index: {}]
  %s8 = sld [smem:[#allocation0]]
  $region54: #{tpu_custom_call.1} parent=0
    _
  %s10 = ssub.s32 1, %s8
  %s11 = scalar_select 0, %s10, %s8
  $region1: #{tpu_custom_call.1} parent=0
    #allocation2 [shape = 'u8[4096]{0}', space=vmem, size = 0x1000, scoped, tag = 'input window, operand 0, single buffered']
    #allocation3 [shape = 's32[1]{0}', space=sflag, size = 0x4, scoped, tag = 'scoped memory for tpu_custom_call.1']
    #allocation4 [shape = 's32[1]{0}', space=sflag, size = 0x4, scoped, tag = 'scoped memory for tpu_custom_call.1']
    #allocation5 [shape = 'u8[4096]{0}', space=vmem, size = 0x1000, scoped, tag = 'input window, operand 1, single buffered']
    #allocation6 [shape = 's32[1]{0}', space=sflag, size = 0x4, scoped, tag = 'scoped memory for tpu_custom_call.1']
    #allocation7 [shape = 'u8[32768]{0}', space=vmem, size = 0x8000, scoped, tag = 'input window, operand 3, single buffered']
    #allocation8 [shape = 'u8[32768]{0}', space=vmem, size = 0x8000, scoped, tag = 'input window, operand 5, single buffered']
    #allocation9 [shape = 's32[1]{0}', space=sflag, size = 0x4, scoped, tag = 'scoped memory for tpu_custom_call.1']
    #allocation10 [shape = 'u8[4096]{0}', space=vmem, size = 0x1000, scoped, tag = 'output window, operand 0, single buffered']
    %12 = vsyncpa [#allocation3], 0
    %13 = vsyncpa [#allocation6], 0
    %14 = vsyncpa [#allocation9], 0
    %15 = vsyncpa [#allocation4], 0
    // Predicated region
    $region2: #{tpu_custom_call.1} parent=1 // pred_check
      _
    $region3: #{tpu_custom_call.1} parent=1 // pred_check_branch
      %17 = sbr.rel (0) target = $region5
    $region4: #{tpu_custom_call.1} parent=1 // pred_region
      %19 = vsyncadd [#allocation3], 0
      %s21 = sshll.u32 %s0, 4
      %s22 = int_to_ptr.hbm [resolvable:$true] %s21
      %s23 = sshll.u32 [#allocation2], 4
      %s24 = int_to_ptr.vmem [resolvable:$true] %s23
      %26 = dma.hbm_to_vmem [thread:$0]  %s22, 128, %s24, [#allocation3]
    $region5: #{tpu_custom_call.1} parent=1 // pred_fallthru
      _
    // Predicated region
    $region6: #{tpu_custom_call.1} parent=1 // pred_check
      _
    $region7: #{tpu_custom_call.1} parent=1 // pred_check_branch
      %28 = sbr.rel (0) target = $region9
    $region8: #{tpu_custom_call.1} parent=1 // pred_region
      %30 = vsyncadd [#allocation6], 0
      %s31 = sshll.u32 %s1, 4
      %s32 = int_to_ptr.hbm [resolvable:$true] %s31
      %s33 = sshll.u32 [#allocation5], 4
      %s34 = int_to_ptr.vmem [resolvable:$true] %s33
      %39 = dma.hbm_to_vmem [thread:$0]  %s32, 128, %s34, [#allocation6], 64, 64, 4
    $region9: #{tpu_custom_call.1} parent=1 // pred_fallthru
      _
    // Predicated region
    $region10: #{tpu_custom_call.1} parent=1 // pred_check
      _
    $region11: #{tpu_custom_call.1} parent=1 // pred_check_branch
      %41 = sbr.rel (0) target = $region13
    $region12: #{tpu_custom_call.1} parent=1 // pred_region
      _
    $region13: #{tpu_custom_call.1} parent=1 // pred_fallthru
      _
    // Predicated region
    $region14: #{tpu_custom_call.1} parent=1 // pred_check
      _
    $region15: #{tpu_custom_call.1} parent=1 // pred_check_branch
      %43 = sbr.rel (0) target = $region17
    $region16: #{tpu_custom_call.1} parent=1 // pred_region
      %45 = vsyncadd [#allocation6], 0
      %s46 = sshll.u32 %s3, 4
      %s47 = int_to_ptr.hbm [resolvable:$true] %s46
      %s48 = sshll.u32 [#allocation7], 4
      %s49 = int_to_ptr.vmem [resolvable:$true] %s48
      %54 = dma.hbm_to_vmem [thread:$0]  %s47, 1024, %s49, [#allocation6], 64, 64, 4
    $region17: #{tpu_custom_call.1} parent=1 // pred_fallthru
      _
    // Predicated region
    $region18: #{tpu_custom_call.1} parent=1 // pred_check
      _
    $region19: #{tpu_custom_call.1} parent=1 // pred_check_branch
      %56 = sbr.rel (0) target = $region21
    $region20: #{tpu_custom_call.1} parent=1 // pred_region
      _
    $region21: #{tpu_custom_call.1} parent=1 // pred_fallthru
      _
    // Predicated region
    $region22: #{tpu_custom_call.1} parent=1 // pred_check
      _
    $region23: #{tpu_custom_call.1} parent=1 // pred_check_branch
      %58 = sbr.rel (0) target = $region25
    $region24: #{tpu_custom_call.1} parent=1 // pred_region
      %60 = vsyncadd [#allocation9], 0
      %s61 = sshll.u32 %s5, 4
      %s62 = int_to_ptr.hbm [resolvable:$true] %s61
      %s63 = sshll.u32 [#allocation8], 4
      %s64 = int_to_ptr.vmem [resolvable:$true] %s63
      %69 = dma.hbm_to_vmem [thread:$0]  %s62, 1024, %s64, [#allocation9], 64, 64, 4
    $region25: #{tpu_custom_call.1} parent=1 // pred_fallthru
      _
    // Predicated region
    $region26: #{tpu_custom_call.1} parent=1 // pred_check
      _
    $region27: #{tpu_custom_call.1} parent=1 // pred_check_branch
      %71 = sbr.rel (0) target = $region29
    $region28: #{tpu_custom_call.1} parent=1 // pred_region
      _
    $region29: #{tpu_custom_call.1} parent=1 // pred_fallthru
      _
    // Predicated region
    $region30: #{tpu_custom_call.1} parent=1 // pred_check
      _
    $region31: #{tpu_custom_call.1} parent=1 // pred_check_branch
      %73 = sbr.rel (0) target = $region33
    $region32: #{tpu_custom_call.1} parent=1 // pred_region
      %75 = dma.done [#allocation3], 128
    $region33: #{tpu_custom_call.1} parent=1 // pred_fallthru
      _
    // Predicated region
    $region34: #{tpu_custom_call.1} parent=1 // pred_check
      _
    $region35: #{tpu_custom_call.1} parent=1 // pred_check_branch
      %77 = sbr.rel (0) target = $region37
    $region36: #{tpu_custom_call.1} parent=1 // pred_region
      %79 = dma.done [#allocation6], 128
    $region37: #{tpu_custom_call.1} parent=1 // pred_fallthru
      _
    // Predicated region
    $region38: #{tpu_custom_call.1} parent=1 // pred_check
      _
    $region39: #{tpu_custom_call.1} parent=1 // pred_check_branch
      %81 = sbr.rel (0) target = $region41
    $region40: #{tpu_custom_call.1} parent=1 // pred_region
      %83 = dma.done [#allocation6], 1024
    $region41: #{tpu_custom_call.1} parent=1 // pred_fallthru
      _
    // Predicated region
    $region42: #{tpu_custom_call.1} parent=1 // pred_check
      _
    $region43: #{tpu_custom_call.1} parent=1 // pred_check_branch
      %85 = sbr.rel (0) target = $region45
    $region44: #{tpu_custom_call.1} parent=1 // pred_region
      %87 = dma.done [#allocation9], 1024
    $region45: #{tpu_custom_call.1} parent=1 // pred_fallthru
      _
    %v89 = vld [vmem:[#allocation2] sm:$0xff]
    %v90 = vpack.c.bf16 %v89, %v89
    %v91 = vld [vmem:[#allocation5] sm:$0xf]
    %v92 = vld [vmem:[#allocation5 + $0x4] sm:$0xf]
    %v93 = vld [vmem:[%s2] sm:$0x1]
    %v95 = vperm.slane %v93, 0
    %v99 = vunpack.c.l.b16 %v91
    %v100 = vunpack.c.l.b16 %v92
    %v101 = vpack.c.b16 %v100, %v99
    %vm103 = vcmask 130048
    %v105 = vsel %vm103, %v90, 0
    %107 = vmatpush.bf16.msra.mxu0 0
    %108 = vmatpush.bf16.msra.mxu0 0
    %109 = vmatpush.bf16.msra.mxu0 0
    %110 = vmatpush.bf16.msra.mxu0 0
    %111 = vmatpush.bf16.msra.mxu0 0
    %112 = vmatpush.bf16.msra.mxu0 0
    %113 = vmatpush.bf16.msra.mxu0 0
    %114 = vmatpush.bf16.msra.mxu0 %v101
    %115 = vmatmul.bf16.gmra.mxu0 %v105
    %v116 = vpop.f32.mrf.mxu0
    %v117 = vadd.f32 %v95, %v116
    %v118 = vpop.f32.mrf.mxu0
    %119 = vdwg.mxu0
    %v120 = vmul.f32 %v117, 0.1
    %v121 = vmax.f32 %v117, %v120
    %v122 = vpack.c.bf16 %v121, %v121
    %v123 = vld [vmem:[#allocation7] sm:$0xf]
    %v124 = vld [vmem:[#allocation7 + $0x4] sm:$0xf]
    %v125 = vld [vmem:[#allocation7 + $0x8] sm:$0xf]
    %v126 = vld [vmem:[#allocation7 + $0xc] sm:$0xf]
    %v127 = vld [vmem:[#allocation7 + $0x10] sm:$0xf]
    %v128 = vld [vmem:[#allocation7 + $0x14] sm:$0xf]
    %v129 = vld [vmem:[#allocation7 + $0x18] sm:$0xf]
    %v130 = vld [vmem:[#allocation7 + $0x1c] sm:$0xf]
    %v131 = vld [vmem:[#allocation7 + $0x20] sm:$0xf]
    %v132 = vld [vmem:[#allocation7 + $0x24] sm:$0xf]
    %v133 = vld [vmem:[#allocation7 + $0x28] sm:$0xf]
    %v134 = vld [vmem:[#allocation7 + $0x2c] sm:$0xf]
    %v135 = vld [vmem:[#allocation7 + $0x30] sm:$0xf]
    %v136 = vld [vmem:[#allocation7 + $0x34] sm:$0xf]
    %v137 = vld [vmem:[#allocation7 + $0x38] sm:$0xf]
    %v138 = vld [vmem:[#allocation7 + $0x3c] sm:$0xf]
    %v139 = vld [vmem:[%s4] sm:$0x1]
    %v141 = vperm.slane %v139, 0
    %v159 = vunpack.c.l.b16 %v123
    %v160 = vunpack.c.l.b16 %v124
    %v161 = vunpack.c.l.b16 %v125
    %v162 = vunpack.c.l.b16 %v126
    %v163 = vunpack.c.l.b16 %v127
    %v164 = vunpack.c.l.b16 %v128
    %v165 = vunpack.c.l.b16 %v129
    %v166 = vunpack.c.l.b16 %v130
    %v167 = vunpack.c.l.b16 %v131
    %v168 = vunpack.c.l.b16 %v132
    %v169 = vunpack.c.l.b16 %v133
    %v170 = vunpack.c.l.b16 %v134
    %v171 = vunpack.c.l.b16 %v135
    %v172 = vunpack.c.l.b16 %v136
    %v173 = vunpack.c.l.b16 %v137
    %v174 = vunpack.c.l.b16 %v138
    %v175 = vpack.c.b16 %v160, %v159
    %v176 = vpack.c.b16 %v162, %v161
    %v177 = vpack.c.b16 %v164, %v163
    %v178 = vpack.c.b16 %v166, %v165
    %v179 = vpack.c.b16 %v168, %v167
    %v180 = vpack.c.b16 %v170, %v169
    %v181 = vpack.c.b16 %v172, %v171
    %v182 = vpack.c.b16 %v174, %v173
    %191 = vmatpush.bf16.msra.mxu0 %v182
    %192 = vmatpush.bf16.msra.mxu0 %v181
    %193 = vmatpush.bf16.msra.mxu0 %v180
    %194 = vmatpush.bf16.msra.mxu0 %v179
    %195 = vmatpush.bf16.msra.mxu0 %v178
    %196 = vmatpush.bf16.msra.mxu0 %v177
    %197 = vmatpush.bf16.msra.mxu0 %v176
    %198 = vmatpush.bf16.msra.mxu0 %v175
    %199 = vmatmul.bf16.gmra.mxu0 %v122
    %v200 = vpop.f32.mrf.mxu0
    %v201 = vadd.f32 %v141, %v200
    %v202 = vpop.f32.mrf.mxu0
    %203 = vdwg.mxu0
    %v204 = vmul.f32 %v201, 0.1
    %v205 = vmax.f32 %v201, %v204
    %v206 = vpack.c.bf16 %v205, %v205
    %v207 = vld [vmem:[#allocation8] sm:$0xf]
    %v208 = vld [vmem:[#allocation8 + $0x4] sm:$0xf]
    %v209 = vld [vmem:[#allocation8 + $0x8] sm:$0xf]
    %v210 = vld [vmem:[#allocation8 + $0xc] sm:$0xf]
    %v211 = vld [vmem:[#allocation8 + $0x10] sm:$0xf]
    %v212 = vld [vmem:[#allocation8 + $0x14] sm:$0xf]
    %v213 = vld [vmem:[#allocation8 + $0x18] sm:$0xf]
    %v214 = vld [vmem:[#allocation8 + $0x1c] sm:$0xf]
    %v215 = vld [vmem:[#allocation8 + $0x20] sm:$0xf]
    %v216 = vld [vmem:[#allocation8 + $0x24] sm:$0xf]
    %v217 = vld [vmem:[#allocation8 + $0x28] sm:$0xf]
    %v218 = vld [vmem:[#allocation8 + $0x2c] sm:$0xf]
    %v219 = vld [vmem:[#allocation8 + $0x30] sm:$0xf]
    %v220 = vld [vmem:[#allocation8 + $0x34] sm:$0xf]
    %v221 = vld [vmem:[#allocation8 + $0x38] sm:$0xf]
    %v222 = vld [vmem:[#allocation8 + $0x3c] sm:$0xf]
    %v223 = vld [vmem:[%s6] sm:$0x1]
    %v225 = vperm.slane %v223, 0
    %v243 = vunpack.c.l.b16 %v207
    %v244 = vunpack.c.l.b16 %v208
    %v245 = vunpack.c.l.b16 %v209
    %v246 = vunpack.c.l.b16 %v210
    %v247 = vunpack.c.l.b16 %v211
    %v248 = vunpack.c.l.b16 %v212
    %v249 = vunpack.c.l.b16 %v213
    %v250 = vunpack.c.l.b16 %v214
    %v251 = vunpack.c.l.b16 %v215
    %v252 = vunpack.c.l.b16 %v216
    %v253 = vunpack.c.l.b16 %v217
    %v254 = vunpack.c.l.b16 %v218
    %v255 = vunpack.c.l.b16 %v219
    %v256 = vunpack.c.l.b16 %v220
    %v257 = vunpack.c.l.b16 %v221
    %v258 = vunpack.c.l.b16 %v222
    %v259 = vpack.c.b16 %v244, %v243
    %v260 = vpack.c.b16 %v246, %v245
    %v261 = vpack.c.b16 %v248, %v247
    %v262 = vpack.c.b16 %v250, %v249
    %v263 = vpack.c.b16 %v252, %v251
    %v264 = vpack.c.b16 %v254, %v253
    %v265 = vpack.c.b16 %v256, %v255
    %v266 = vpack.c.b16 %v258, %v257
    %275 = vmatpush.bf16.msra.mxu0 %v266
    %276 = vmatpush.bf16.msra.mxu0 %v265
    %277 = vmatpush.bf16.msra.mxu0 %v264
    %278 = vmatpush.bf16.msra.mxu0 %v263
    %279 = vmatpush.bf16.msra.mxu0 %v262
    %280 = vmatpush.bf16.msra.mxu0 %v261
    %281 = vmatpush.bf16.msra.mxu0 %v260
    %282 = vmatpush.bf16.msra.mxu0 %v259
    %283 = vmatmul.bf16.gmra.mxu0 %v206
    %v284 = vpop.f32.mrf.mxu0
    %v285 = vadd.f32 %v225, %v284
    %v286 = vpop.f32.mrf.mxu0
    %287 = vdwg.mxu0
    %v288 = vmul.f32 %v285, 0.1
    %v289 = vmax.f32 %v285, %v288
    %290 = vst [vmem:[#allocation10] sm:$0xff] %v289
    // Predicated region
    $region46: #{tpu_custom_call.1} parent=1 // pred_check
      _
    $region47: #{tpu_custom_call.1} parent=1 // pred_check_branch
      %292 = sbr.rel (0) target = $region49
    $region48: #{tpu_custom_call.1} parent=1 // pred_region
      %294 = vsyncadd [#allocation4], 0
      %s296 = sshll.u32 [#allocation10], 4
      %s297 = int_to_ptr.vmem [resolvable:$true] %s296
      %s298 = sshll.u32 %s7, 4
      %s299 = int_to_ptr.hbm [resolvable:$true] %s298
      %301 = dma.vmem_to_hbm [thread:$0]  %s297, 128, %s299, [#allocation4]
    $region49: #{tpu_custom_call.1} parent=1 // pred_fallthru
      _
    // Predicated region
    $region50: #{tpu_custom_call.1} parent=1 // pred_check
      _
    $region51: #{tpu_custom_call.1} parent=1 // pred_check_branch
      %303 = sbr.rel (0) target = $region53
    $region52: #{tpu_custom_call.1} parent=1 // pred_region
      %305 = dma.done [#allocation4], 128
    $region53: #{tpu_custom_call.1} parent=1 // pred_fallthru
      _
    %306 = vsyncpa [#allocation3], 1
    %307 = vsyncpa [#allocation6], 1
    %308 = vsyncpa [#allocation9], 1
    %309 = vsyncpa [#allocation4], 1

</llo_original>
